<compile_context>
chip_gen: v6e
topology: v6e:2x2x1
jax: 0.10.0
libtpu: 0.0.40
codegen_flags: <defaults>
</compile_context>

<pallas_src>
import jax
import jax.numpy as jnp
from jax import lax
from jax.experimental import pallas as pl
from jax.experimental.pallas import tpu as pltpu


N_TRACK = 10
N_WAYPOINTS = 3
HALF_IN = 2 * N_TRACK            # 20 (per side)
IN_DIM = 2 * HALF_IN             # 40
H1, H2, H3 = 256, 128, 64
OUT_DIM = N_WAYPOINTS * 2        # 6
OUT_PAD = 8                      # sublane-padded output rows (6 real + 2 zero)


def _mlp_kernel(x_ref,
                w1_ref, b1_ref,
                w2_ref, b2_ref,
                w3_ref, b3_ref,
                w4t_ref, b4t_ref,
                o_ref):
    # x: (TB, 40) f32 tile of concat([left, right]) flattened track points.
    x = x_ref[...].astype(jnp.bfloat16)

    # Layer 1 (single fused K=40 dot), f32 accumulation, f32 bias/ReLU.
    h = jnp.dot(x, w1_ref[...], preferred_element_type=jnp.float32) + b1_ref[...]
    h = jnp.maximum(h, 0.0)
    # Dropout(0.1) is identity at inference — no-op.

    h = jnp.dot(h.astype(jnp.bfloat16), w2_ref[...],
                preferred_element_type=jnp.float32) + b2_ref[...]
    h = jnp.maximum(h, 0.0)
    # Dropout(0.1) is identity at inference — no-op.

    h = jnp.dot(h.astype(jnp.bfloat16), w3_ref[...],
                preferred_element_type=jnp.float32) + b3_ref[...]
    h = jnp.maximum(h, 0.0)

    # Last layer computed transposed for lane-dense (and now sublane-dense)
    # stores: (8, 64) contracted with (TB, 64) on the 64-dim -> (8, TB).
    y_t = lax.dot_general(
        w4t_ref[...], h.astype(jnp.bfloat16),
        dimension_numbers=(((1,), (1,)), ((), ())),
        preferred_element_type=jnp.float32) + b4t_ref[...]
    o_ref[...] = y_t.astype(o_ref.dtype)


def init_params(key):
    """Deterministic init mimicking torch.nn.Linear default (U(-1/sqrt(fan_in), +)).

    Weights are stored in bf16 (MXU-native); biases stay f32.
    """
    dims = [(IN_DIM, H1), (H1, H2), (H2, H3), (H3, OUT_DIM)]
    ws, bs = [], []
    for fan_in, fan_out in dims:
        key, kw, kb = jax.random.split(key, 3)
        bound = 1.0 / float(fan_in) ** 0.5
        # stored as (in, out) so the kernel computes x @ W (== torch x @ W.T)
        ws.append(jax.random.uniform(kw, (fan_in, fan_out), jnp.float32,
                                     minval=-bound, maxval=bound))
        bs.append(jax.random.uniform(kb, (1, fan_out), jnp.float32,
                                     minval=-bound, maxval=bound))
    w1, w2, w3, w4 = ws
    b1, b2, b3, b4 = bs

    # Transposed + sublane-padded last layer: (8, 64) with 2 zero rows.
    w4t_pad = jnp.zeros((OUT_PAD, H3), jnp.float32).at[:OUT_DIM].set(w4.T)
    b4t_pad = jnp.zeros((OUT_PAD, 1), jnp.float32).at[:OUT_DIM, 0].set(b4[0])

    return {
        "w1": w1.astype(jnp.bfloat16),          # (40, 256)
        "b1": b1,                                # (1, 256) f32
        "w2": w2.astype(jnp.bfloat16), "b2": b2,
        "w3": w3.astype(jnp.bfloat16), "b3": b3,
        "w4t": w4t_pad.astype(jnp.bfloat16),     # (8, 64) bf16
        "b4t": b4t_pad,                          # (8, 1) f32
    }


def _round_up(x, m):
    return ((x + m - 1) // m) * m


def _choose_batch_tile(b):
    """Return (tb, b_pad).

    * 128-aligned tiles whenever B >= 128 (fully unmasked lane stores),
    * >= 2 grid steps whenever the batch allows it (v7x 2-TC sharding),
    * cap 1024, tile sized round_up(ceil(B/steps), 128) to limit tail padding.
    """
    cap = 1024
    if b < 128:
        tb = max(8, _round_up(b, 8))     # single small tile; masked stores ok
        return tb, tb
    num_steps = max(2, pl.cdiv(b, cap))
    tb = min(cap, _round_up(pl.cdiv(b, num_steps), 128))
    b_pad = _round_up(b, tb)
    return tb, b_pad


def mlp_planner_forward(params, track_left, track_right):
    """track_left, track_right: (B, n_track, 2) float32 -> (B, n_waypoints, 2)."""
    b = track_left.shape[0]
    # Single (B, 40) input: concat fuses with the padding pass below; feeding
    # one K=40 dot halves layer-1's MXU push count vs two K=20 dots.
    x = jnp.concatenate(
        [track_left.reshape(b, HALF_IN), track_right.reshape(b, HALF_IN)],
        axis=1).astype(jnp.float32)

    tb, b_pad = _choose_batch_tile(b)
    if b_pad != b:
        x = jnp.pad(x, ((0, b_pad - b), (0, 0)))

    grid = (b_pad // tb,)

    def resident(arr):
        # Weights/biases: same block every grid step -> stay resident in VMEM.
        nd = arr.ndim
        return pl.BlockSpec(arr.shape, lambda i, _nd=nd: (0,) * _nd)

    in_specs = [
        pl.BlockSpec((tb, IN_DIM), lambda i: (i, 0)),    # x tile
        resident(params["w1"]), resident(params["b1"]),
        resident(params["w2"]), resident(params["b2"]),
        resident(params["w3"]), resident(params["b3"]),
        resident(params["w4t"]), resident(params["b4t"]),
    ]
    # Transposed, sublane-padded output: (8, B_pad), batch on the 128-lane axis.
    out_specs = pl.BlockSpec((OUT_PAD, tb), lambda i: (0, i))

    flops = 2 * b_pad * (IN_DIM * H1 + H1 * H2 + H2 * H3 + H3 * OUT_PAD)
    weight_bytes = 2 * (IN_DIM * H1 + H1 * H2 + H2 * H3 + OUT_PAD * H3) \
        + 4 * (H1 + H2 + H3 + OUT_PAD)
    bytes_accessed = b_pad * 4 * (IN_DIM + OUT_PAD) + weight_bytes

    out_t = pl.pallas_call(
        _mlp_kernel,
        out_shape=jax.ShapeDtypeStruct((OUT_PAD, b_pad), jnp.float32),
        grid=grid,
        in_specs=in_specs,
        out_specs=out_specs,
        compiler_params=pltpu.CompilerParams(
            dimension_semantics=("parallel",)),      # 2-TC sharding on v7x
        cost_estimate=pl.CostEstimate(
            flops=flops, transcendentals=0, bytes_accessed=bytes_accessed),
    )(x,
      params["w1"], params["b1"],
      params["w2"], params["b2"],
      params["w3"], params["b3"],
      params["w4t"], params["b4t"])

    # (8, B_pad) -> (B, 6) -> (B, n_waypoints, 2): wrapper-side layout plumbing.
    return out_t.T[:b, :OUT_DIM].reshape(b, N_WAYPOINTS, 2)


def _reference_forward(params, track_left, track_right):
    """Pure-JAX f32 reference of the same forward pass (bf16-stored weights)."""
    b = track_left.shape[0]
    x = jnp.concatenate(
        [track_left.reshape(b, -1), track_right.reshape(b, -1)], axis=1)
    h = jax.nn.relu(x @ params["w1"].astype(jnp.float32) + params["b1"])
    h = jax.nn.relu(h @ params["w2"].astype(jnp.float32) + params["b2"])
    h = jax.nn.relu(h @ params["w3"].astype(jnp.float32) + params["b3"])
    y = h @ params["w4t"].astype(jnp.float32).T + params["b4t"].T
    return y[:, :OUT_DIM].reshape(b, N_WAYPOINTS, 2)


if __name__ == "__main__":
    key = jax.random.PRNGKey(0)
    key, k_params, k_left, k_right = jax.random.split(key, 4)

    params = init_params(k_params)

    batch = 2
    track_left = jax.random.normal(k_left, (batch, N_TRACK, 2), jnp.float32)
    track_right = jax.random.normal(k_right, (batch, N_TRACK, 2), jnp.float32)

    waypoints = jax.block_until_ready(
        mlp_planner_forward(params, track_left, track_right))

    ref = _reference_forward(params, track_left, track_right)
    assert waypoints.shape == (batch, N_WAYPOINTS, 2)
    # bf16 MXU path: tolerance widened vs the previous all-f32 version.
    assert jnp.allclose(waypoints, ref, atol=5e-2, rtol=5e-2), \
        float(jnp.max(jnp.abs(waypoints - ref)))

    print("KERNEL_OK")
</pallas_src>

<mosaic_0001>
module attributes {stable_mosaic.version = 11 : i64} {
  func.func @_mlp_kernel(%arg0: i32, %arg1: memref<8x40xf32, #tpu.memory_space<vmem>>, %arg2: memref<40x256xbf16, #tpu.memory_space<vmem>>, %arg3: memref<1x256xf32, #tpu.memory_space<vmem>>, %arg4: memref<256x128xbf16, #tpu.memory_space<vmem>>, %arg5: memref<1x128xf32, #tpu.memory_space<vmem>>, %arg6: memref<128x64xbf16, #tpu.memory_space<vmem>>, %arg7: memref<1x64xf32, #tpu.memory_space<vmem>>, %arg8: memref<8x64xbf16, #tpu.memory_space<vmem>>, %arg9: memref<8x1xf32, #tpu.memory_space<vmem>>, %arg10: memref<8x8xf32, #tpu.memory_space<vmem>>) attributes {dimension_semantics = [#tpu.dimension_semantics<parallel>], iteration_bounds = array<i64: 1>, scalar_prefetch = 0 : i64, scratch_operands = 0 : i64, tpu.core_type = #tpu.core_type<tc>, window_params = [{transform_indices = @transform_0, window_bounds = array<i64: 8, 40>}, {pipeline_mode = #tpu.pipeline_mode<synchronous>, transform_indices = @transform_1, window_bounds = array<i64: 40, 256>}, {pipeline_mode = #tpu.pipeline_mode<synchronous>, transform_indices = @transform_2, window_bounds = array<i64: 1, 256>}, {pipeline_mode = #tpu.pipeline_mode<synchronous>, transform_indices = @transform_3, window_bounds = array<i64: 256, 128>}, {pipeline_mode = #tpu.pipeline_mode<synchronous>, transform_indices = @transform_4, window_bounds = array<i64: 1, 128>}, {pipeline_mode = #tpu.pipeline_mode<synchronous>, transform_indices = @transform_5, window_bounds = array<i64: 128, 64>}, {pipeline_mode = #tpu.pipeline_mode<synchronous>, transform_indices = @transform_6, window_bounds = array<i64: 1, 64>}, {pipeline_mode = #tpu.pipeline_mode<synchronous>, transform_indices = @transform_7, window_bounds = array<i64: 8, 64>}, {pipeline_mode = #tpu.pipeline_mode<synchronous>, transform_indices = @transform_8, window_bounds = array<i64: 8, 1>}, {transform_indices = @transform_9, window_bounds = array<i64: 8, 8>}]} {
    %c0 = arith.constant 0 : index
    %c0_0 = arith.constant 0 : index
    %0 = vector.load %arg1[%c0, %c0_0] : memref<8x40xf32, #tpu.memory_space<vmem>>, vector<8x40xf32>
    %1 = arith.truncf %0 : vector<8x40xf32> to vector<8x40xbf16>
    %c0_1 = arith.constant 0 : index
    %c0_2 = arith.constant 0 : index
    %2 = vector.load %arg2[%c0_1, %c0_2] : memref<40x256xbf16, #tpu.memory_space<vmem>>, vector<40x256xbf16>
    %cst = arith.constant dense<0.000000e+00> : vector<8x256xf32>
    %3 = tpu.matmul %1, %2, %cst {dimension_numbers = #tpu.dot_dimension_numbers<[1], [0], [0], [1], [0, 0, 1, 1], [], []>} : vector<8x40xbf16>, vector<40x256xbf16>, vector<8x256xf32> -> vector<8x256xf32>
    %c0_3 = arith.constant 0 : index
    %c0_4 = arith.constant 0 : index
    %4 = vector.load %arg3[%c0_3, %c0_4] : memref<1x256xf32, #tpu.memory_space<vmem>>, vector<1x256xf32>
    %5 = vector.broadcast %4 : vector<1x256xf32> to vector<8x256xf32>
    %6 = arith.addf %3, %5 : vector<8x256xf32>
    %cst_5 = arith.constant 0.000000e+00 : f32
    %7 = vector.broadcast %cst_5 : f32 to vector<8x256xf32>
    %8 = arith.maximumf %6, %7 : vector<8x256xf32>
    %9 = arith.truncf %8 : vector<8x256xf32> to vector<8x256xbf16>
    %c0_6 = arith.constant 0 : index
    %c0_7 = arith.constant 0 : index
    %10 = vector.load %arg4[%c0_6, %c0_7] : memref<256x128xbf16, #tpu.memory_space<vmem>>, vector<256x128xbf16>
    %cst_8 = arith.constant dense<0.000000e+00> : vector<8x128xf32>
    %11 = tpu.matmul %9, %10, %cst_8 {dimension_numbers = #tpu.dot_dimension_numbers<[1], [0], [0], [1], [0, 0, 1, 1], [], []>} : vector<8x256xbf16>, vector<256x128xbf16>, vector<8x128xf32> -> vector<8x128xf32>
    %c0_9 = arith.constant 0 : index
    %c0_10 = arith.constant 0 : index
    %12 = vector.load %arg5[%c0_9, %c0_10] : memref<1x128xf32, #tpu.memory_space<vmem>>, vector<1x128xf32>
    %13 = vector.broadcast %12 : vector<1x128xf32> to vector<8x128xf32>
    %14 = arith.addf %11, %13 : vector<8x128xf32>
    %cst_11 = arith.constant 0.000000e+00 : f32
    %15 = vector.broadcast %cst_11 : f32 to vector<8x128xf32>
    %16 = arith.maximumf %14, %15 : vector<8x128xf32>
    %17 = arith.truncf %16 : vector<8x128xf32> to vector<8x128xbf16>
    %c0_12 = arith.constant 0 : index
    %c0_13 = arith.constant 0 : index
    %18 = vector.load %arg6[%c0_12, %c0_13] : memref<128x64xbf16, #tpu.memory_space<vmem>>, vector<128x64xbf16>
    %cst_14 = arith.constant dense<0.000000e+00> : vector<8x64xf32>
    %19 = tpu.matmul %17, %18, %cst_14 {dimension_numbers = #tpu.dot_dimension_numbers<[1], [0], [0], [1], [0, 0, 1, 1], [], []>} : vector<8x128xbf16>, vector<128x64xbf16>, vector<8x64xf32> -> vector<8x64xf32>
    %c0_15 = arith.constant 0 : index
    %c0_16 = arith.constant 0 : index
    %20 = vector.load %arg7[%c0_15, %c0_16] : memref<1x64xf32, #tpu.memory_space<vmem>>, vector<1x64xf32>
    %21 = vector.broadcast %20 : vector<1x64xf32> to vector<8x64xf32>
    %22 = arith.addf %19, %21 : vector<8x64xf32>
    %cst_17 = arith.constant 0.000000e+00 : f32
    %23 = vector.broadcast %cst_17 : f32 to vector<8x64xf32>
    %24 = arith.maximumf %22, %23 : vector<8x64xf32>
    %c0_18 = arith.constant 0 : index
    %c0_19 = arith.constant 0 : index
    %25 = vector.load %arg8[%c0_18, %c0_19] : memref<8x64xbf16, #tpu.memory_space<vmem>>, vector<8x64xbf16>
    %26 = arith.truncf %24 : vector<8x64xf32> to vector<8x64xbf16>
    %cst_20 = arith.constant dense<0.000000e+00> : vector<8x8xf32>
    %27 = tpu.matmul %25, %26, %cst_20 {dimension_numbers = #tpu.dot_dimension_numbers<[1], [1], [0], [0], [0, 0, 1, 0], [], []>} : vector<8x64xbf16>, vector<8x64xbf16>, vector<8x8xf32> -> vector<8x8xf32>
    %c0_21 = arith.constant 0 : index
    %c0_22 = arith.constant 0 : index
    %28 = vector.load %arg9[%c0_21, %c0_22] : memref<8x1xf32, #tpu.memory_space<vmem>>, vector<8x1xf32>
    %29 = vector.broadcast %28 : vector<8x1xf32> to vector<8x8xf32>
    %30 = arith.addf %27, %29 : vector<8x8xf32>
    %c0_23 = arith.constant 0 : index
    %c0_24 = arith.constant 0 : index
    %31 = vector.load %arg10[%c0_23, %c0_24] : memref<8x8xf32, #tpu.memory_space<vmem>>, vector<8x8xf32>
    tpu.vector_store %arg10[%c0_23, %c0_24], %30 {strides = array<i32>} : memref<8x8xf32, #tpu.memory_space<vmem>>, vector<8x8xf32>,
    return
  }
  func.func @transform_0(%arg0: i32) -> (i32, i32) {
    %c0_i32 = arith.constant 0 : i32
    %c0_i32_0 = arith.constant 0 : i32
    return %arg0, %c0_i32 : i32, i32
  }
  func.func @transform_1(%arg0: i32) -> (i32, i32) {
    %c0_i32 = arith.constant 0 : i32
    %c0_i32_0 = arith.constant 0 : i32
    %c0_i32_1 = arith.constant 0 : i32
    return %c0_i32, %c0_i32_0 : i32, i32
  }
  func.func @transform_2(%arg0: i32) -> (i32, i32) {
    %c0_i32 = arith.constant 0 : i32
    %c0_i32_0 = arith.constant 0 : i32
    %c0_i32_1 = arith.constant 0 : i32
    return %c0_i32, %c0_i32_0 : i32, i32
  }
  func.func @transform_3(%arg0: i32) -> (i32, i32) {
    %c0_i32 = arith.constant 0 : i32
    %c0_i32_0 = arith.constant 0 : i32
    %c0_i32_1 = arith.constant 0 : i32
    return %c0_i32, %c0_i32_0 : i32, i32
  }
  func.func @transform_4(%arg0: i32) -> (i32, i32) {
    %c0_i32 = arith.constant 0 : i32
    %c0_i32_0 = arith.constant 0 : i32
    %c0_i32_1 = arith.constant 0 : i32
    return %c0_i32, %c0_i32_0 : i32, i32
  }
  func.func @transform_5(%arg0: i32) -> (i32, i32) {
    %c0_i32 = arith.constant 0 : i32
    %c0_i32_0 = arith.constant 0 : i32
    %c0_i32_1 = arith.constant 0 : i32
    return %c0_i32, %c0_i32_0 : i32, i32
  }
  func.func @transform_6(%arg0: i32) -> (i32, i32) {
    %c0_i32 = arith.constant 0 : i32
    %c0_i32_0 = arith.constant 0 : i32
    %c0_i32_1 = arith.constant 0 : i32
    return %c0_i32, %c0_i32_0 : i32, i32
  }
  func.func @transform_7(%arg0: i32) -> (i32, i32) {
    %c0_i32 = arith.constant 0 : i32
    %c0_i32_0 = arith.constant 0 : i32
    %c0_i32_1 = arith.constant 0 : i32
    return %c0_i32, %c0_i32_0 : i32, i32
  }
  func.func @transform_8(%arg0: i32) -> (i32, i32) {
    %c0_i32 = arith.constant 0 : i32
    %c0_i32_0 = arith.constant 0 : i32
    %c0_i32_1 = arith.constant 0 : i32
    return %c0_i32, %c0_i32_0 : i32, i32
  }
  func.func @transform_9(%arg0: i32) -> (i32, i32) {
    %c0_i32 = arith.constant 0 : i32
    %c0_i32_0 = arith.constant 0 : i32
    return %c0_i32, %arg0 : i32, i32
  }
}

</mosaic_0001>

<llo_original>
// kernel: tpu_custom_call.1
$region0: #{tpu_custom_call.1}
  #allocation0 [shape = 'u32[]', space=smem, size = 0x4, offset = 0x4, fixed_abs, tag = 'smem constant byte address 0x4 - core index']
  #allocation1 [shape = 'u32[144,128]{1,0:T(1,128)}', space=vmem, size = 0x12000, scoped, tag = 'internal scratch']
  %s0 = inlined_call_operand.vmem [shape: f32[8,40], index: 0, kind: input, shape index: {}]
  %s1 = inlined_call_operand.vmem [shape: bf16[40,256], index: 1, kind: input, shape index: {}]
  %s2 = inlined_call_operand.vmem [shape: f32[1,256], index: 2, kind: input, shape index: {}]
  %s3 = inlined_call_operand.hbm [shape: bf16[256,128], index: 3, kind: input, shape index: {}]
  %s4 = inlined_call_operand.vmem [shape: f32[1,128], index: 4, kind: input, shape index: {}]
  %s5 = inlined_call_operand.vmem [shape: bf16[128,64], index: 5, kind: input, shape index: {}]
  %s6 = inlined_call_operand.vmem [shape: f32[1,64], index: 6, kind: input, shape index: {}]
  %s7 = inlined_call_operand.vmem [shape: bf16[8,64], index: 7, kind: input, shape index: {}]
  %s8 = inlined_call_operand.vmem [shape: f32[8,1], index: 8, kind: input, shape index: {}]
  %s9 = inlined_call_operand.hbm [shape: f32[8,8], index: 9, kind: output, shape index: {}]
  %s10 = sld [smem:[#allocation0]]
  $region50: #{tpu_custom_call.1} parent=0
    _
  %s12 = ssub.s32 1, %s10
  %s13 = scalar_select 0, %s12, %s10
  $region1: #{tpu_custom_call.1} parent=0
    #allocation2 [shape = 'u8[65536]{0}', space=vmem, size = 0x10000, scoped, tag = 'input window, operand 3, single buffered']
    #allocation3 [shape = 's32[1]{0}', space=sflag, size = 0x4, scoped, tag = 'scoped memory for tpu_custom_call.1']
    #allocation4 [shape = 's32[1]{0}', space=sflag, size = 0x4, scoped, tag = 'scoped memory for tpu_custom_call.1']
    #allocation5 [shape = 'u8[4096]{0}', space=vmem, size = 0x1000, scoped, tag = 'output window, operand 0, single buffered']
    %14 = vsyncpa [#allocation3], 0
    %15 = vsyncpa [#allocation4], 0
    // Predicated region
    $region2: #{tpu_custom_call.1} parent=1 // pred_check
      _
    $region3: #{tpu_custom_call.1} parent=1 // pred_check_branch
      %17 = sbr.rel (0) target = $region5
    $region4: #{tpu_custom_call.1} parent=1 // pred_region
      _
    $region5: #{tpu_custom_call.1} parent=1 // pred_fallthru
      _
    // Predicated region
    $region6: #{tpu_custom_call.1} parent=1 // pred_check
      _
    $region7: #{tpu_custom_call.1} parent=1 // pred_check_branch
      %19 = sbr.rel (0) target = $region9
    $region8: #{tpu_custom_call.1} parent=1 // pred_region
      _
    $region9: #{tpu_custom_call.1} parent=1 // pred_fallthru
      _
    // Predicated region
    $region10: #{tpu_custom_call.1} parent=1 // pred_check
      _
    $region11: #{tpu_custom_call.1} parent=1 // pred_check_branch
      %21 = sbr.rel (0) target = $region13
    $region12: #{tpu_custom_call.1} parent=1 // pred_region
      _
    $region13: #{tpu_custom_call.1} parent=1 // pred_fallthru
      _
    // Predicated region
    $region14: #{tpu_custom_call.1} parent=1 // pred_check
      _
    $region15: #{tpu_custom_call.1} parent=1 // pred_check_branch
      %23 = sbr.rel (0) target = $region17
    $region16: #{tpu_custom_call.1} parent=1 // pred_region
      %s25 = ssub.s32 2048, 2048
      %26 = vsyncadd [#allocation3], %s25
      %s27 = sshll.u32 [#allocation2], 4
      %s28 = int_to_ptr.vmem [resolvable:$true] %s27
      %33 = dma.hbm_to_vmem [thread:$0]  %s3, 2048, %s28, [#allocation3], 64, 64, 4
    $region17: #{tpu_custom_call.1} parent=1 // pred_fallthru
      _
    // Predicated region
    $region18: #{tpu_custom_call.1} parent=1 // pred_check
      _
    $region19: #{tpu_custom_call.1} parent=1 // pred_check_branch
      %35 = sbr.rel (0) target = $region21
    $region20: #{tpu_custom_call.1} parent=1 // pred_region
      _
    $region21: #{tpu_custom_call.1} parent=1 // pred_fallthru
      _
    // Predicated region
    $region22: #{tpu_custom_call.1} parent=1 // pred_check
      _
    $region23: #{tpu_custom_call.1} parent=1 // pred_check_branch
      %37 = sbr.rel (0) target = $region25
    $region24: #{tpu_custom_call.1} parent=1 // pred_region
      _
    $region25: #{tpu_custom_call.1} parent=1 // pred_fallthru
      _
    // Predicated region
    $region26: #{tpu_custom_call.1} parent=1 // pred_check
      _
    $region27: #{tpu_custom_call.1} parent=1 // pred_check_branch
      %39 = sbr.rel (0) target = $region29
    $region28: #{tpu_custom_call.1} parent=1 // pred_region
      _
    $region29: #{tpu_custom_call.1} parent=1 // pred_fallthru
      _
    // Predicated region
    $region30: #{tpu_custom_call.1} parent=1 // pred_check
      _
    $region31: #{tpu_custom_call.1} parent=1 // pred_check_branch
      %41 = sbr.rel (0) target = $region33
    $region32: #{tpu_custom_call.1} parent=1 // pred_region
      _
    $region33: #{tpu_custom_call.1} parent=1 // pred_fallthru
      _
    // Predicated region
    $region34: #{tpu_custom_call.1} parent=1 // pred_check
      _
    $region35: #{tpu_custom_call.1} parent=1 // pred_check_branch
      %43 = sbr.rel (0) target = $region37
    $region36: #{tpu_custom_call.1} parent=1 // pred_region
      _
    $region37: #{tpu_custom_call.1} parent=1 // pred_fallthru
      _
    // Predicated region
    $region38: #{tpu_custom_call.1} parent=1 // pred_check
      _
    $region39: #{tpu_custom_call.1} parent=1 // pred_check_branch
      %45 = sbr.rel (0) target = $region41
    $region40: #{tpu_custom_call.1} parent=1 // pred_region
      %46 = dma.done [#allocation3], 2048
    $region41: #{tpu_custom_call.1} parent=1 // pred_fallthru
      _
    %v48 = vld [vmem:[%s0] sm:$0xff]
    %v49 = vpack.c.bf16 %v48, %v48
    %v50 = vld [vmem:[%s1] sm:$0xff]
    %v51 = vld [vmem:[%s1 + $0x8] sm:$0xff]
    %v52 = vld [vmem:[%s1 + $0x10] sm:$0xff]
    %v53 = vld [vmem:[%s1 + $0x18] sm:$0xff]
    %v54 = vld [vmem:[%s1 + $0x20] sm:$0xff]
    %v55 = vld [vmem:[%s2] sm:$0x3]
    %v57 = vlaneseq
    %v58 = vshrl.u32 %v57, 7
    %v59 = vsub.s32 0, %v58
    %v60 = vrot.slane %v55, %v59
    %v61 = vlaneseq
    %v62 = vshrl.u32 %v61, 7
    %v63 = vsub.s32 1, %v62
    %v64 = vrot.slane %v55, %v63
    %v72 = vunpack.c.l.b16 %v50
    %v73 = vunpack.c.h.b16 %v50
    %v74 = vunpack.c.l.b16 %v51
    %v75 = vunpack.c.h.b16 %v51
    %v76 = vunpack.c.l.b16 %v52
    %v77 = vunpack.c.h.b16 %v52
    %v78 = vunpack.c.l.b16 %v53
    %v79 = vunpack.c.h.b16 %v53
    %v80 = vunpack.c.l.b16 %v54
    %v81 = vunpack.c.h.b16 %v54
    %v82 = vpack.c.b16 %v74, %v72
    %v83 = vpack.c.b16 %v75, %v73
    %v84 = vpack.c.b16 %v78, %v76
    %v85 = vpack.c.b16 %v79, %v77
    %v86 = vpack.c.b16 %v80, %v80
    %v87 = vpack.c.b16 %v81, %v81
    %vm92 = vcmask 326656
    %v94 = vsel %vm92, %v49, 0
    %vm96 = vcmask 1043456
    %v98 = vsel %vm96, %v86, 0
    %v101 = vsel %vm96, %v87, 0
    %103 = vmatprep.subr.bf16.mxu0 0
    %104 = vmatpush1.bf16.msra.mxu0 0
    %105 = vmatprep.subr.bf16.mxu0 0
    %106 = vmatpush1.bf16.msra.mxu0 0
    %107 = vmatprep.subr.bf16.mxu0 0
    %108 = vmatpush1.bf16.msra.mxu0 0
    %109 = vmatprep.subr.bf16.mxu0 0
    %110 = vmatpush1.bf16.msra.mxu0 0
    %111 = vmatprep.subr.bf16.mxu0 0
    %112 = vmatpush1.bf16.msra.mxu0 0
    %113 = vmatprep.subr.bf16.mxu0 %v101
    %114 = vmatpush1.bf16.msra.mxu0 %v98
    %115 = vmatprep.subr.bf16.mxu0 %v85
    %116 = vmatpush1.bf16.msra.mxu0 %v84
    %117 = vmatprep.subr.bf16.mxu0 %v83
    %118 = vmatpush1.bf16.msra.mxu0 %v82
    %119 = vmatprep.subr.bf16.mxu0 0
    %120 = vmatpush2.bf16.msra.mxu0 0
    %121 = vmatprep.subr.bf16.mxu0 0
    %122 = vmatpush2.bf16.msra.mxu0 0
    %123 = vmatprep.subr.bf16.mxu0 0
    %124 = vmatpush2.bf16.msra.mxu0 0
    %125 = vmatprep.subr.bf16.mxu0 0
    %126 = vmatpush2.bf16.msra.mxu0 0
    %127 = vmatprep.subr.bf16.mxu0 0
    %128 = vmatpush2.bf16.msra.mxu0 0
    %129 = vmatprep.subr.bf16.mxu0 0
    %130 = vmatpush2.bf16.msra.mxu0 0
    %131 = vmatprep.subr.bf16.mxu0 0
    %132 = vmatpush2.bf16.msra.mxu0 0
    %133 = vmatprep.subr.bf16.mxu0 0
    %134 = vmatpush2.bf16.msra.mxu0 0
    %135 = vmatprep.mubr.bf16.mxu0 0
    %136 = vmatmul.mubr.bf16.gmra.mxu0 %v94
    %v137 = vpop.f32.mrf.mxu0
    %v138 = vadd.f32 %v60, %v137
    %v139 = vpop.f32.mrf.mxu0
    %v140 = vadd.f32 %v64, %v139
    %v141 = vpop.f32.mrf.mxu0
    %v142 = vpop.f32.mrf.mxu0
    %143 = vdwg.mxu0
    %v144 = vmax.f32 %v138, 0.0
    %v145 = vmax.f32 %v140, 0.0
    %v146 = vpack.c.bf16 %v144, %v144
    %v147 = vpack.c.bf16 %v145, %v145
    %v148 = vld [vmem:[#allocation2] sm:$0xf]
    %v149 = vld [vmem:[#allocation2 + $0x4] sm:$0xf]
    %v150 = vld [vmem:[#allocation2 + $0x8] sm:$0xf]
    %v151 = vld [vmem:[#allocation2 + $0xc] sm:$0xf]
    %v152 = vld [vmem:[#allocation2 + $0x10] sm:$0xf]
    %v153 = vld [vmem:[#allocation2 + $0x14] sm:$0xf]
    %v154 = vld [vmem:[#allocation2 + $0x18] sm:$0xf]
    %v155 = vld [vmem:[#allocation2 + $0x1c] sm:$0xf]
    %v156 = vld [vmem:[#allocation2 + $0x20] sm:$0xf]
    %v157 = vld [vmem:[#allocation2 + $0x24] sm:$0xf]
    %v158 = vld [vmem:[#allocation2 + $0x28] sm:$0xf]
    %v159 = vld [vmem:[#allocation2 + $0x2c] sm:$0xf]
    %v160 = vld [vmem:[#allocation2 + $0x30] sm:$0xf]
    %v161 = vld [vmem:[#allocation2 + $0x34] sm:$0xf]
    %v162 = vld [vmem:[#allocation2 + $0x38] sm:$0xf]
    %v163 = vld [vmem:[#allocation2 + $0x3c] sm:$0xf]
    %v164 = vld [vmem:[#allocation2 + $0x40] sm:$0xf]
    %v165 = vld [vmem:[#allocation2 + $0x44] sm:$0xf]
    %v166 = vld [vmem:[#allocation2 + $0x48] sm:$0xf]
    %v167 = vld [vmem:[#allocation2 + $0x4c] sm:$0xf]
    %v168 = vld [vmem:[#allocation2 + $0x50] sm:$0xf]
    %v169 = vld [vmem:[#allocation2 + $0x54] sm:$0xf]
    %v170 = vld [vmem:[#allocation2 + $0x58] sm:$0xf]
    %v171 = vld [vmem:[#allocation2 + $0x5c] sm:$0xf]
    %v172 = vld [vmem:[#allocation2 + $0x60] sm:$0xf]
    %v173 = vld [vmem:[#allocation2 + $0x64] sm:$0xf]
    %v174 = vld [vmem:[#allocation2 + $0x68] sm:$0xf]
    %v175 = vld [vmem:[#allocation2 + $0x6c] sm:$0xf]
    %v176 = vld [vmem:[#allocation2 + $0x70] sm:$0xf]
    %v177 = vld [vmem:[#allocation2 + $0x74] sm:$0xf]
    %v178 = vld [vmem:[#allocation2 + $0x78] sm:$0xf]
    %v179 = vld [vmem:[#allocation2 + $0x7c] sm:$0xf]
    %v180 = vld [vmem:[%s4] sm:$0x1]
    %v182 = vlaneseq
    %v183 = vshrl.u32 %v182, 7
    %v184 = vsub.s32 0, %v183
    %v185 = vrot.slane %v180, %v184
    %v219 = vunpack.c.l.b16 %v148
    %v220 = vunpack.c.l.b16 %v149
    %v221 = vunpack.c.l.b16 %v150
    %v222 = vunpack.c.l.b16 %v151
    %v223 = vunpack.c.l.b16 %v152
    %v224 = vunpack.c.l.b16 %v153
    %v225 = vunpack.c.l.b16 %v154
    %v226 = vunpack.c.l.b16 %v155
    %v227 = vunpack.c.l.b16 %v156
    %v228 = vunpack.c.l.b16 %v157
    %v229 = vunpack.c.l.b16 %v158
    %v230 = vunpack.c.l.b16 %v159
    %v231 = vunpack.c.l.b16 %v160
    %v232 = vunpack.c.l.b16 %v161
    %v233 = vunpack.c.l.b16 %v162
    %v234 = vunpack.c.l.b16 %v163
    %v235 = vunpack.c.l.b16 %v164
    %v236 = vunpack.c.l.b16 %v165
    %v237 = vunpack.c.l.b16 %v166
    %v238 = vunpack.c.l.b16 %v167
    %v239 = vunpack.c.l.b16 %v168
    %v240 = vunpack.c.l.b16 %v169
    %v241 = vunpack.c.l.b16 %v170
    %v242 = vunpack.c.l.b16 %v171
    %v243 = vunpack.c.l.b16 %v172
    %v244 = vunpack.c.l.b16 %v173
    %v245 = vunpack.c.l.b16 %v174
    %v246 = vunpack.c.l.b16 %v175
    %v247 = vunpack.c.l.b16 %v176
    %v248 = vunpack.c.l.b16 %v177
    %v249 = vunpack.c.l.b16 %v178
    %v250 = vunpack.c.l.b16 %v179
    %v251 = vpack.c.b16 %v220, %v219
    %v252 = vpack.c.b16 %v222, %v221
    %v253 = vpack.c.b16 %v224, %v223
    %v254 = vpack.c.b16 %v226, %v225
    %v255 = vpack.c.b16 %v228, %v227
    %v256 = vpack.c.b16 %v230, %v229
    %v257 = vpack.c.b16 %v232, %v231
    %v258 = vpack.c.b16 %v234, %v233
    %v259 = vpack.c.b16 %v236, %v235
    %v260 = vpack.c.b16 %v238, %v237
    %v261 = vpack.c.b16 %v240, %v239
    %v262 = vpack.c.b16 %v242, %v241
    %v263 = vpack.c.b16 %v244, %v243
    %v264 = vpack.c.b16 %v246, %v245
    %v265 = vpack.c.b16 %v248, %v247
    %v266 = vpack.c.b16 %v250, %v249
    %283 = vmatprep.subr.bf16.mxu0 0
    %284 = vmatpush1.bf16.msra.mxu0 %v258
    %285 = vmatprep.subr.bf16.mxu0 0
    %286 = vmatpush1.bf16.msra.mxu0 %v257
    %287 = vmatprep.subr.bf16.mxu0 0
    %288 = vmatpush1.bf16.msra.mxu0 %v256
    %289 = vmatprep.subr.bf16.mxu0 0
    %290 = vmatpush1.bf16.msra.mxu0 %v255
    %291 = vmatprep.subr.bf16.mxu0 0
    %292 = vmatpush1.bf16.msra.mxu0 %v254
    %293 = vmatprep.subr.bf16.mxu0 0
    %294 = vmatpush1.bf16.msra.mxu0 %v253
    %295 = vmatprep.subr.bf16.mxu0 0
    %296 = vmatpush1.bf16.msra.mxu0 %v252
    %297 = vmatprep.subr.bf16.mxu0 0
    %298 = vmatpush1.bf16.msra.mxu0 %v251
    %299 = vmatprep.subr.bf16.mxu0 0
    %300 = vmatpush2.bf16.msra.mxu0 %v266
    %301 = vmatprep.subr.bf16.mxu0 0
    %302 = vmatpush2.bf16.msra.mxu0 %v265
    %303 = vmatprep.subr.bf16.mxu0 0
    %304 = vmatpush2.bf16.msra.mxu0 %v264
    %305 = vmatprep.subr.bf16.mxu0 0
    %306 = vmatpush2.bf16.msra.mxu0 %v263
    %307 = vmatprep.subr.bf16.mxu0 0
    %308 = vmatpush2.bf16.msra.mxu0 %v262
    %309 = vmatprep.subr.bf16.mxu0 0
    %310 = vmatpush2.bf16.msra.mxu0 %v261
    %311 = vmatprep.subr.bf16.mxu0 0
    %312 = vmatpush2.bf16.msra.mxu0 %v260
    %313 = vmatprep.subr.bf16.mxu0 0
    %314 = vmatpush2.bf16.msra.mxu0 %v259
    %315 = vmatprep.mubr.bf16.mxu0 %v147
    %316 = vmatmul.mubr.bf16.gmra.mxu0 %v146
    %v317 = vpop.f32.mrf.mxu0
    %v318 = vadd.f32 %v185, %v317
    %v319 = vpop.f32.mrf.mxu0
    %v320 = vpop.f32.mrf.mxu0
    %v321 = vpop.f32.mrf.mxu0
    %322 = vdwg.mxu0
    %v323 = vmax.f32 %v318, 0.0
    %v324 = vpack.c.bf16 %v323, %v323
    %v325 = vld [vmem:[%s5] sm:$0xf]
    %v326 = vld [vmem:[%s5 + $0x4] sm:$0xf]
    %v327 = vld [vmem:[%s5 + $0x8] sm:$0xf]
    %v328 = vld [vmem:[%s5 + $0xc] sm:$0xf]
    %v329 = vld [vmem:[%s5 + $0x10] sm:$0xf]
    %v330 = vld [vmem:[%s5 + $0x14] sm:$0xf]
    %v331 = vld [vmem:[%s5 + $0x18] sm:$0xf]
    %v332 = vld [vmem:[%s5 + $0x1c] sm:$0xf]
    %v333 = vld [vmem:[%s5 + $0x20] sm:$0xf]
    %v334 = vld [vmem:[%s5 + $0x24] sm:$0xf]
    %v335 = vld [vmem:[%s5 + $0x28] sm:$0xf]
    %v336 = vld [vmem:[%s5 + $0x2c] sm:$0xf]
    %v337 = vld [vmem:[%s5 + $0x30] sm:$0xf]
    %v338 = vld [vmem:[%s5 + $0x34] sm:$0xf]
    %v339 = vld [vmem:[%s5 + $0x38] sm:$0xf]
    %v340 = vld [vmem:[%s5 + $0x3c] sm:$0xf]
    %v341 = vld [vmem:[%s6] sm:$0x1]
    %v343 = vlaneseq
    %v344 = vshrl.u32 %v343, 7
    %v345 = vsub.s32 0, %v344
    %v346 = vrot.slane %v341, %v345
    %v364 = vunpack.c.l.b16 %v325
    %v365 = vunpack.c.l.b16 %v326
    %v366 = vunpack.c.l.b16 %v327
    %v367 = vunpack.c.l.b16 %v328
    %v368 = vunpack.c.l.b16 %v329
    %v369 = vunpack.c.l.b16 %v330
    %v370 = vunpack.c.l.b16 %v331
    %v371 = vunpack.c.l.b16 %v332
    %v372 = vunpack.c.l.b16 %v333
    %v373 = vunpack.c.l.b16 %v334
    %v374 = vunpack.c.l.b16 %v335
    %v375 = vunpack.c.l.b16 %v336
    %v376 = vunpack.c.l.b16 %v337
    %v377 = vunpack.c.l.b16 %v338
    %v378 = vunpack.c.l.b16 %v339
    %v379 = vunpack.c.l.b16 %v340
    %v380 = vpack.c.b16 %v365, %v364
    %v381 = vpack.c.b16 %v367, %v366
    %v382 = vpack.c.b16 %v369, %v368
    %v383 = vpack.c.b16 %v371, %v370
    %v384 = vpack.c.b16 %v373, %v372
    %v385 = vpack.c.b16 %v375, %v374
    %v386 = vpack.c.b16 %v377, %v376
    %v387 = vpack.c.b16 %v379, %v378
    %396 = vmatprep.subr.bf16.mxu0 0
    %397 = vmatpush1.bf16.msra.mxu0 %v387
    %398 = vmatprep.subr.bf16.mxu0 0
    %399 = vmatpush1.bf16.msra.mxu0 %v386
    %400 = vmatprep.subr.bf16.mxu0 0
    %401 = vmatpush1.bf16.msra.mxu0 %v385
    %402 = vmatprep.subr.bf16.mxu0 0
    %403 = vmatpush1.bf16.msra.mxu0 %v384
    %404 = vmatprep.subr.bf16.mxu0 0
    %405 = vmatpush1.bf16.msra.mxu0 %v383
    %406 = vmatprep.subr.bf16.mxu0 0
    %407 = vmatpush1.bf16.msra.mxu0 %v382
    %408 = vmatprep.subr.bf16.mxu0 0
    %409 = vmatpush1.bf16.msra.mxu0 %v381
    %410 = vmatprep.subr.bf16.mxu0 0
    %411 = vmatpush1.bf16.msra.mxu0 %v380
    %412 = vmatprep.subr.bf16.mxu0 0
    %413 = vmatpush2.bf16.msra.mxu0 0
    %414 = vmatprep.subr.bf16.mxu0 0
    %415 = vmatpush2.bf16.msra.mxu0 0
    %416 = vmatprep.subr.bf16.mxu0 0
    %417 = vmatpush2.bf16.msra.mxu0 0
    %418 = vmatprep.subr.bf16.mxu0 0
    %419 = vmatpush2.bf16.msra.mxu0 0
    %420 = vmatprep.subr.bf16.mxu0 0
    %421 = vmatpush2.bf16.msra.mxu0 0
    %422 = vmatprep.subr.bf16.mxu0 0
    %423 = vmatpush2.bf16.msra.mxu0 0
    %424 = vmatprep.subr.bf16.mxu0 0
    %425 = vmatpush2.bf16.msra.mxu0 0
    %426 = vmatprep.subr.bf16.mxu0 0
    %427 = vmatpush2.bf16.msra.mxu0 0
    %428 = vmatprep.mubr.bf16.mxu0 0
    %429 = vmatmul.mubr.bf16.gmra.mxu0 %v324
    %v430 = vpop.f32.mrf.mxu0
    %v431 = vadd.f32 %v346, %v430
    %v432 = vpop.f32.mrf.mxu0
    %v433 = vpop.f32.mrf.mxu0
    %v434 = vpop.f32.mrf.mxu0
    %435 = vdwg.mxu0
    %v436 = vmax.f32 %v431, 0.0
    %v437 = vld [vmem:[%s7] sm:$0xf]
    %v438 = vpack.c.bf16 %v436, %v436
    %v439 = vld [vmem:[%s8] sm:$0xff]
    %441 = vset.pattern.permute.xlu0 0
    %442 = vperm.xlu0 %441, %v439
    %v443 = vpop.permute.xlu0 %442
    %vm445 = vcmask 523264
    %v447 = vsel %vm445, %v437, 0
    %v450 = vsel %vm445, %v438, 0
    %452 = vmatprep.subr.bf16.mxu0 0
    %453 = vmatpush1.bf16.xpose.msra.mxu0 0
    %454 = vmatprep.subr.bf16.mxu0 0
    %455 = vmatpush1.bf16.xpose.msra.mxu0 0
    %456 = vmatprep.subr.bf16.mxu0 0
    %457 = vmatpush1.bf16.xpose.msra.mxu0 0
    %458 = vmatprep.subr.bf16.mxu0 0
    %459 = vmatpush1.bf16.xpose.msra.mxu0 0
    %460 = vmatprep.subr.bf16.mxu0 0
    %461 = vmatpush1.bf16.xpose.msra.mxu0 0
    %462 = vmatprep.subr.bf16.mxu0 0
    %463 = vmatpush1.bf16.xpose.msra.mxu0 0
    %464 = vmatprep.subr.bf16.mxu0 0
    %465 = vmatpush1.bf16.xpose.msra.mxu0 0
    %466 = vmatprep.subr.bf16.mxu0 0
    %467 = vmatpush1.bf16.xpose.msra.mxu0 %v450
    %468 = vmatprep.subr.bf16.mxu0 0
    %469 = vmatpush2.bf16.xpose.msra.mxu0 0
    %470 = vmatprep.subr.bf16.mxu0 0
    %471 = vmatpush2.bf16.xpose.msra.mxu0 0
    %472 = vmatprep.subr.bf16.mxu0 0
    %473 = vmatpush2.bf16.xpose.msra.mxu0 0
    %474 = vmatprep.subr.bf16.mxu0 0
    %475 = vmatpush2.bf16.xpose.msra.mxu0 0
    %476 = vmatprep.subr.bf16.mxu0 0
    %477 = vmatpush2.bf16.xpose.msra.mxu0 0
    %478 = vmatprep.subr.bf16.mxu0 0
    %479 = vmatpush2.bf16.xpose.msra.mxu0 0
    %480 = vmatprep.subr.bf16.mxu0 0
    %481 = vmatpush2.bf16.xpose.msra.mxu0 0
    %482 = vmatprep.subr.bf16.mxu0 0
    %483 = vmatpush2.bf16.xpose.msra.mxu0 0
    %484 = vmatprep.mubr.bf16.mxu0 0
    %485 = vmatmul.mubr.bf16.gmra.mxu0 %v447
    %v486 = vpop.f32.mrf.mxu0
    %v487 = vadd.f32 %v443, %v486
    %v488 = vpop.f32.mrf.mxu0
    %v489 = vpop.f32.mrf.mxu0
    %v490 = vpop.f32.mrf.mxu0
    %491 = vdwg.mxu0
    %vm492 = vcmask 64512
    %493 = vst.msk [vmem:[#allocation5] sm:$0xff] %vm492, %v487
    // Predicated region
    $region42: #{tpu_custom_call.1} parent=1 // pred_check
      _
    $region43: #{tpu_custom_call.1} parent=1 // pred_check_branch
      %495 = sbr.rel (0) target = $region45
    $region44: #{tpu_custom_call.1} parent=1 // pred_region
      %s497 = ssub.s32 128, 128
      %498 = vsyncadd [#allocation4], %s497
      %s500 = sshll.u32 [#allocation5], 4
      %s501 = int_to_ptr.vmem [resolvable:$true] %s500
      %503 = dma.vmem_to_hbm [thread:$0]  %s501, 128, %s9, [#allocation4]
    $region45: #{tpu_custom_call.1} parent=1 // pred_fallthru
      _
    // Predicated region
    $region46: #{tpu_custom_call.1} parent=1 // pred_check
      _
    $region47: #{tpu_custom_call.1} parent=1 // pred_check_branch
      %505 = sbr.rel (0) target = $region49
    $region48: #{tpu_custom_call.1} parent=1 // pred_region
      %506 = dma.done [#allocation4], 128
    $region49: #{tpu_custom_call.1} parent=1 // pred_fallthru
      _
    %507 = vsyncpa [#allocation3], 1
    %508 = vsyncpa [#allocation4], 1

</llo_original>
